<compile_context>
chip_gen: v5e
topology: v5e:2x2
jax: 0.10.0
libtpu: 0.0.40
codegen_flags: <defaults>
</compile_context>

<pallas_src>
import functools

import jax
import jax.numpy as jnp
from jax.experimental import pallas as pl
from jax.experimental.pallas import tpu as pltpu


# ------------------------------ Pallas kernel -------------------------------

def _categorical_kernel(x_ref, w_ref, b_ref, g_ref,
                        logits_ref, act_ref, logp_ref, mode_ref):
    """Fused Linear + Categorical distribution head for one batch tile.

    x_ref : (bm, K)  bf16  features
    w_ref : (K, A)   bf16  linear weight (orthogonal init, gain=0.01)
    b_ref : (1, A)   f32   linear bias (zeros at init)
    g_ref : (bm, A)  f32   Gumbel(0,1) noise for sampling
    outputs:
      logits_ref : (bm, A) f32
      act_ref    : (bm, 1) int32   == FixedCategorical.sample()
      logp_ref   : (bm, 1) f32     == FixedCategorical.log_probs(action)
      mode_ref   : (bm, 1) int32   == FixedCategorical.mode()
    """
    # Linear: MXU matmul, f32 accumulation + f32 bias epilogue.
    logits = jnp.dot(x_ref[...], w_ref[...], preferred_element_type=jnp.float32)
    logits = logits + b_ref[...]
    logits_ref[...] = logits

    iota = jax.lax.broadcasted_iota(jnp.int32, logits.shape, 1)
    big = jnp.float32(1e9)

    def argmax_first(z):
        # first index attaining the row max (matches torch/jnp argmax tie-breaking)
        zmax = jnp.max(z, axis=-1, keepdims=True)
        idx = jnp.min(jnp.where(z >= zmax, iota.astype(jnp.float32), big),
                      axis=-1, keepdims=True)
        return idx.astype(jnp.int32)

    # sample(): Gumbel-max over logits (== Categorical(logits).sample()).
    action = argmax_first(logits + g_ref[...])
    act_ref[...] = action                     # torch returns int64; int32 here

    # mode(): argmax of probs == argmax of logits.
    mode_ref[...] = argmax_first(logits)

    # log_probs(action): log_softmax(logits) gathered at `action`, summed -> (bm, 1).
    m = jnp.max(logits, axis=-1, keepdims=True)
    lse = m + jnp.log(jnp.sum(jnp.exp(logits - m), axis=-1, keepdims=True))
    logp_all = logits - lse
    onehot = (iota == action).astype(jnp.float32)
    logp_ref[...] = jnp.sum(logp_all * onehot, axis=-1, keepdims=True)


# ------------------------------ wrapper --------------------------------------

def categorical_forward(x, w, b, gumbel, *, block_m=256):
    """x: (B, K) f32, w: (K, A), b: (A,), gumbel: (B, A) -> (logits, action, logp, mode)."""
    B, K = x.shape
    A = w.shape[1]
    bm = min(block_m, B)
    pad = (-B) % bm
    if pad:
        x = jnp.pad(x, ((0, pad), (0, 0)))
        gumbel = jnp.pad(gumbel, ((0, pad), (0, 0)))
    Bp = x.shape[0]

    logits, action, logp, mode = pl.pallas_call(
        _categorical_kernel,
        out_shape=(jax.ShapeDtypeStruct((Bp, A), jnp.float32),
                   jax.ShapeDtypeStruct((Bp, 1), jnp.int32),
                   jax.ShapeDtypeStruct((Bp, 1), jnp.float32),
                   jax.ShapeDtypeStruct((Bp, 1), jnp.int32)),
        grid=(Bp // bm,),
        in_specs=[pl.BlockSpec((bm, K), lambda i: (i, 0)),
                  pl.BlockSpec((K, A), lambda i: (0, 0)),   # weight resident in VMEM
                  pl.BlockSpec((1, A), lambda i: (0, 0)),
                  pl.BlockSpec((bm, A), lambda i: (i, 0))],
        out_specs=(pl.BlockSpec((bm, A), lambda i: (i, 0)),
                   pl.BlockSpec((bm, 1), lambda i: (i, 0)),
                   pl.BlockSpec((bm, 1), lambda i: (i, 0)),
                   pl.BlockSpec((bm, 1), lambda i: (i, 0))),
        compiler_params=pltpu.CompilerParams(
            dimension_semantics=("parallel",)),
    )(x.astype(jnp.bfloat16), w.astype(jnp.bfloat16),
      b.reshape(1, A).astype(jnp.float32), gumbel.astype(jnp.float32))

    if pad:
        logits, action, logp, mode = (logits[:B], action[:B], logp[:B], mode[:B])
    return logits, action, logp, mode


# ------------------------------ parameters -----------------------------------

def make_params(key, num_inputs, num_outputs):
    """nn.Linear(num_inputs, num_outputs) with init_fn(gain=0.01): orth weight, zero bias."""
    w = jax.nn.initializers.orthogonal(scale=0.01)(
        key, (num_inputs, num_outputs), jnp.float32)
    b = jnp.zeros((num_outputs,), jnp.float32)
    return w, b


# --------------------------------- main ---------------------------------------

if __name__ == "__main__":
    key = jax.random.PRNGKey(0)
    wkey, xkey, gkey = jax.random.split(key, 3)

    B, NUM_INPUTS, NUM_ACTIONS = 4, 64, 15       # small shapes for the demo
    w, b = make_params(wkey, NUM_INPUTS, NUM_ACTIONS)
    x = jax.random.normal(xkey, (B, NUM_INPUTS), dtype=jnp.float32)
    gumbel = jax.random.gumbel(gkey, (B, NUM_ACTIONS), dtype=jnp.float32)

    fwd = jax.jit(functools.partial(categorical_forward))
    logits, action, logp, mode = jax.block_until_ready(fwd(x, w, b, gumbel))

    # ---- shape / dtype checks ----
    assert logits.shape == (B, NUM_ACTIONS) and logits.dtype == jnp.float32
    assert action.shape == (B, 1) and action.dtype == jnp.int32
    assert logp.shape == (B, 1) and logp.dtype == jnp.float32
    assert mode.shape == (B, 1) and mode.dtype == jnp.int32

    # ---- semantic checks against a plain-JAX reference ----
    ref_logits = x @ w + b                                        # f32 reference
    assert bool(jnp.all(jnp.abs(logits - ref_logits) < 1e-2))     # bf16-matmul tolerance

    # sample(): Gumbel-max over the (kernel) logits
    ref_action = jnp.argmax(logits + gumbel, axis=-1, keepdims=True).astype(jnp.int32)
    assert bool(jnp.all(action == ref_action))
    assert bool(jnp.all((action >= 0) & (action < NUM_ACTIONS)))

    # mode(): argmax of logits
    ref_mode = jnp.argmax(logits, axis=-1, keepdims=True).astype(jnp.int32)
    assert bool(jnp.all(mode == ref_mode))

    # log_probs(action): log_softmax(logits)[action]
    ref_logp = jnp.take_along_axis(jax.nn.log_softmax(logits, axis=-1),
                                   action, axis=-1)
    assert bool(jnp.all(jnp.abs(logp - ref_logp) < 1e-4))
    assert bool(jnp.all(logp <= 0.0))

    print("KERNEL_OK")
</pallas_src>

<mosaic_0001>
module attributes {stable_mosaic.version = 11 : i64} {
  func.func @_categorical_kernel(%arg0: i32, %arg1: memref<4x64xbf16, #tpu.memory_space<vmem>>, %arg2: memref<64x15xbf16, #tpu.memory_space<vmem>>, %arg3: memref<1x15xf32, #tpu.memory_space<vmem>>, %arg4: memref<4x15xf32, #tpu.memory_space<vmem>>, %arg5: memref<4x15xf32, #tpu.memory_space<vmem>>, %arg6: memref<4x1xi32, #tpu.memory_space<vmem>>, %arg7: memref<4x1xf32, #tpu.memory_space<vmem>>, %arg8: memref<4x1xi32, #tpu.memory_space<vmem>>) attributes {dimension_semantics = [#tpu.dimension_semantics<parallel>], iteration_bounds = array<i64: 1>, scalar_prefetch = 0 : i64, scratch_operands = 0 : i64, tpu.core_type = #tpu.core_type<tc>, window_params = [{transform_indices = @transform_0, window_bounds = array<i64: 4, 64>}, {pipeline_mode = #tpu.pipeline_mode<synchronous>, transform_indices = @transform_1, window_bounds = array<i64: 64, 15>}, {pipeline_mode = #tpu.pipeline_mode<synchronous>, transform_indices = @transform_2, window_bounds = array<i64: 1, 15>}, {transform_indices = @transform_3, window_bounds = array<i64: 4, 15>}, {transform_indices = @transform_4, window_bounds = array<i64: 4, 15>}, {transform_indices = @transform_5, window_bounds = array<i64: 4, 1>}, {transform_indices = @transform_6, window_bounds = array<i64: 4, 1>}, {transform_indices = @transform_7, window_bounds = array<i64: 4, 1>}]} {
    %c0 = arith.constant 0 : index
    %c0_0 = arith.constant 0 : index
    %0 = vector.load %arg1[%c0, %c0_0] : memref<4x64xbf16, #tpu.memory_space<vmem>>, vector<4x64xbf16>
    %c0_1 = arith.constant 0 : index
    %c0_2 = arith.constant 0 : index
    %1 = vector.load %arg2[%c0_1, %c0_2] : memref<64x15xbf16, #tpu.memory_space<vmem>>, vector<64x15xbf16>
    %cst = arith.constant dense<0.000000e+00> : vector<4x15xf32>
    %2 = tpu.matmul %0, %1, %cst {dimension_numbers = #tpu.dot_dimension_numbers<[1], [0], [0], [1], [0, 0, 1, 1], [], []>} : vector<4x64xbf16>, vector<64x15xbf16>, vector<4x15xf32> -> vector<4x15xf32>
    %c0_3 = arith.constant 0 : index
    %c0_4 = arith.constant 0 : index
    %3 = vector.load %arg3[%c0_3, %c0_4] : memref<1x15xf32, #tpu.memory_space<vmem>>, vector<1x15xf32>
    %4 = vector.broadcast %3 : vector<1x15xf32> to vector<4x15xf32>
    %5 = arith.addf %2, %4 : vector<4x15xf32>
    %c0_5 = arith.constant 0 : index
    %c0_6 = arith.constant 0 : index
    %6 = vector.load %arg5[%c0_5, %c0_6] : memref<4x15xf32, #tpu.memory_space<vmem>>, vector<4x15xf32>
    tpu.vector_store %arg5[%c0_5, %c0_6], %5 {strides = array<i32>} : memref<4x15xf32, #tpu.memory_space<vmem>>, vector<4x15xf32>,
    %7 = tpu.iota {dimensions = array<i32: 1>} : vector<4x15xi32>
    %c0_7 = arith.constant 0 : index
    %c0_8 = arith.constant 0 : index
    %8 = vector.load %arg4[%c0_7, %c0_8] : memref<4x15xf32, #tpu.memory_space<vmem>>, vector<4x15xf32>
    %9 = arith.addf %5, %8 : vector<4x15xf32>
    %cst_9 = arith.constant dense<0xFF800000> : vector<4xf32>
    %10 = vector.multi_reduction <maximumf>, %9, %cst_9 [1] : vector<4x15xf32> to vector<4xf32>
    %11 = vector.shape_cast %10 : vector<4xf32> to vector<4x1xf32>
    %12 = vector.broadcast %11 : vector<4x1xf32> to vector<4x15xf32>
    %13 = arith.cmpf oge, %9, %12 : vector<4x15xf32>
    %14 = arith.sitofp %7 : vector<4x15xi32> to vector<4x15xf32>
    %cst_10 = arith.constant 1.000000e+09 : f32
    %15 = vector.broadcast %cst_10 : f32 to vector<4x15xf32>
    %16 = arith.select %13, %14, %15 : vector<4x15xi1>, vector<4x15xf32>
    %cst_11 = arith.constant dense<0x7F800000> : vector<4xf32>
    %17 = vector.multi_reduction <minimumf>, %16, %cst_11 [1] : vector<4x15xf32> to vector<4xf32>
    %18 = vector.shape_cast %17 : vector<4xf32> to vector<4x1xf32>
    %19 = arith.fptosi %18 : vector<4x1xf32> to vector<4x1xi32>
    %c0_12 = arith.constant 0 : index
    %c0_13 = arith.constant 0 : index
    %20 = vector.load %arg6[%c0_12, %c0_13] : memref<4x1xi32, #tpu.memory_space<vmem>>, vector<4x1xi32>
    tpu.vector_store %arg6[%c0_12, %c0_13], %19 {strides = array<i32>} : memref<4x1xi32, #tpu.memory_space<vmem>>, vector<4x1xi32>,
    %cst_14 = arith.constant dense<0xFF800000> : vector<4xf32>
    %21 = vector.multi_reduction <maximumf>, %5, %cst_14 [1] : vector<4x15xf32> to vector<4xf32>
    %22 = vector.shape_cast %21 : vector<4xf32> to vector<4x1xf32>
    %23 = vector.broadcast %22 : vector<4x1xf32> to vector<4x15xf32>
    %24 = arith.cmpf oge, %5, %23 : vector<4x15xf32>
    %25 = arith.sitofp %7 : vector<4x15xi32> to vector<4x15xf32>
    %cst_15 = arith.constant 1.000000e+09 : f32
    %26 = vector.broadcast %cst_15 : f32 to vector<4x15xf32>
    %27 = arith.select %24, %25, %26 : vector<4x15xi1>, vector<4x15xf32>
    %cst_16 = arith.constant dense<0x7F800000> : vector<4xf32>
    %28 = vector.multi_reduction <minimumf>, %27, %cst_16 [1] : vector<4x15xf32> to vector<4xf32>
    %29 = vector.shape_cast %28 : vector<4xf32> to vector<4x1xf32>
    %30 = arith.fptosi %29 : vector<4x1xf32> to vector<4x1xi32>
    %c0_17 = arith.constant 0 : index
    %c0_18 = arith.constant 0 : index
    %31 = vector.load %arg8[%c0_17, %c0_18] : memref<4x1xi32, #tpu.memory_space<vmem>>, vector<4x1xi32>
    tpu.vector_store %arg8[%c0_17, %c0_18], %30 {strides = array<i32>} : memref<4x1xi32, #tpu.memory_space<vmem>>, vector<4x1xi32>,
    %cst_19 = arith.constant dense<0xFF800000> : vector<4xf32>
    %32 = vector.multi_reduction <maximumf>, %5, %cst_19 [1] : vector<4x15xf32> to vector<4xf32>
    %33 = vector.shape_cast %32 : vector<4xf32> to vector<4x1xf32>
    %34 = vector.broadcast %33 : vector<4x1xf32> to vector<4x15xf32>
    %35 = arith.subf %5, %34 : vector<4x15xf32>
    %36 = math.exp %35 : vector<4x15xf32>
    %cst_20 = arith.constant dense<0.000000e+00> : vector<4xf32>
    %37 = vector.multi_reduction <add>, %36, %cst_20 [1] : vector<4x15xf32> to vector<4xf32>
    %38 = vector.shape_cast %37 : vector<4xf32> to vector<4x1xf32>
    %39 = math.log %38 : vector<4x1xf32>
    %40 = arith.addf %33, %39 : vector<4x1xf32>
    %41 = vector.broadcast %40 : vector<4x1xf32> to vector<4x15xf32>
    %42 = arith.subf %5, %41 : vector<4x15xf32>
    %43 = vector.broadcast %19 : vector<4x1xi32> to vector<4x15xi32>
    %44 = arith.cmpi eq, %7, %43 : vector<4x15xi32>
    %45 = arith.extui %44 : vector<4x15xi1> to vector<4x15xi32>
    %46 = arith.sitofp %45 : vector<4x15xi32> to vector<4x15xf32>
    %47 = arith.mulf %42, %46 : vector<4x15xf32>
    %cst_21 = arith.constant dense<0.000000e+00> : vector<4xf32>
    %48 = vector.multi_reduction <add>, %47, %cst_21 [1] : vector<4x15xf32> to vector<4xf32>
    %49 = vector.shape_cast %48 : vector<4xf32> to vector<4x1xf32>
    %c0_22 = arith.constant 0 : index
    %c0_23 = arith.constant 0 : index
    %50 = vector.load %arg7[%c0_22, %c0_23] : memref<4x1xf32, #tpu.memory_space<vmem>>, vector<4x1xf32>
    tpu.vector_store %arg7[%c0_22, %c0_23], %49 {strides = array<i32>} : memref<4x1xf32, #tpu.memory_space<vmem>>, vector<4x1xf32>,
    return
  }
  func.func @transform_0(%arg0: i32) -> (i32, i32) {
    %c0_i32 = arith.constant 0 : i32
    %c0_i32_0 = arith.constant 0 : i32
    return %arg0, %c0_i32 : i32, i32
  }
  func.func @transform_1(%arg0: i32) -> (i32, i32) {
    %c0_i32 = arith.constant 0 : i32
    %c0_i32_0 = arith.constant 0 : i32
    %c0_i32_1 = arith.constant 0 : i32
    return %c0_i32, %c0_i32_0 : i32, i32
  }
  func.func @transform_2(%arg0: i32) -> (i32, i32) {
    %c0_i32 = arith.constant 0 : i32
    %c0_i32_0 = arith.constant 0 : i32
    %c0_i32_1 = arith.constant 0 : i32
    return %c0_i32, %c0_i32_0 : i32, i32
  }
  func.func @transform_3(%arg0: i32) -> (i32, i32) {
    %c0_i32 = arith.constant 0 : i32
    %c0_i32_0 = arith.constant 0 : i32
    return %arg0, %c0_i32 : i32, i32
  }
  func.func @transform_4(%arg0: i32) -> (i32, i32) {
    %c0_i32 = arith.constant 0 : i32
    %c0_i32_0 = arith.constant 0 : i32
    return %arg0, %c0_i32 : i32, i32
  }
  func.func @transform_5(%arg0: i32) -> (i32, i32) {
    %c0_i32 = arith.constant 0 : i32
    %c0_i32_0 = arith.constant 0 : i32
    return %arg0, %c0_i32 : i32, i32
  }
  func.func @transform_6(%arg0: i32) -> (i32, i32) {
    %c0_i32 = arith.constant 0 : i32
    %c0_i32_0 = arith.constant 0 : i32
    return %arg0, %c0_i32 : i32, i32
  }
  func.func @transform_7(%arg0: i32) -> (i32, i32) {
    %c0_i32 = arith.constant 0 : i32
    %c0_i32_0 = arith.constant 0 : i32
    return %arg0, %c0_i32 : i32, i32
  }
}

</mosaic_0001>

<llo_original>
// kernel: categorical_forward.1
$region0: #{categorical_forward.1}
  #allocation0 [shape = 'u32[]', space=smem, size = 0x4, offset = 0x4, fixed_abs, tag = 'smem constant byte address 0x4 - core index']
  #allocation1 [shape = 'u32[72,128]{1,0:T(1,128)}', space=vmem, size = 0x9000, scoped, tag = 'internal scratch']
  %s0 = inlined_call_operand.vmem [shape: bf16[4,64], index: 0, kind: input, shape index: {}]
  %s1 = inlined_call_operand.vmem [shape: bf16[64,15], index: 1, kind: input, shape index: {}]
  %s2 = inlined_call_operand.vmem [shape: f32[1,15], index: 2, kind: input, shape index: {}]
  %s3 = inlined_call_operand.vmem [shape: f32[4,15], index: 3, kind: input, shape index: {}]
  %s4 = inlined_call_operand.hbm [shape: f32[4,15], index: 4, kind: output, shape index: {0}]
  %s5 = inlined_call_operand.vmem [shape: s32[4,1], index: 5, kind: output, shape index: {1}]
  %s6 = inlined_call_operand.vmem [shape: f32[4,1], index: 6, kind: output, shape index: {2}]
  %s7 = inlined_call_operand.vmem [shape: s32[4,1], index: 7, kind: output, shape index: {3}]
  %8 = xla_tuple %s4, %s5, %s6, %s7
  %s9 = sld [smem:[#allocation0]]
  $region50: #{categorical_forward.1} parent=0
    _
  %s11 = ssub.s32 1, %s9
  %s12 = scalar_select 0, %s11, %s9
  $region1: #{categorical_forward.1} parent=0
    #allocation2 [shape = 'u8[2048]{0}', space=vmem, size = 0x800, scoped, tag = 'output window, operand 0, single buffered']
    #allocation3 [shape = 's32[1]{0}', space=sflag, size = 0x4, scoped, tag = 'scoped memory for categorical_forward.1']
    %13 = vsyncpa [#allocation3], 0
    // Predicated region
    $region2: #{categorical_forward.1} parent=1 // pred_check
      _
    $region3: #{categorical_forward.1} parent=1 // pred_check_branch
      %15 = sbr.rel (0) target = $region5
    $region4: #{categorical_forward.1} parent=1 // pred_region
      _
    $region5: #{categorical_forward.1} parent=1 // pred_fallthru
      _
    // Predicated region
    $region6: #{categorical_forward.1} parent=1 // pred_check
      _
    $region7: #{categorical_forward.1} parent=1 // pred_check_branch
      %17 = sbr.rel (0) target = $region9
    $region8: #{categorical_forward.1} parent=1 // pred_region
      _
    $region9: #{categorical_forward.1} parent=1 // pred_fallthru
      _
    // Predicated region
    $region10: #{categorical_forward.1} parent=1 // pred_check
      _
    $region11: #{categorical_forward.1} parent=1 // pred_check_branch
      %19 = sbr.rel (0) target = $region13
    $region12: #{categorical_forward.1} parent=1 // pred_region
      _
    $region13: #{categorical_forward.1} parent=1 // pred_fallthru
      _
    // Predicated region
    $region14: #{categorical_forward.1} parent=1 // pred_check
      _
    $region15: #{categorical_forward.1} parent=1 // pred_check_branch
      %21 = sbr.rel (0) target = $region17
    $region16: #{categorical_forward.1} parent=1 // pred_region
      _
    $region17: #{categorical_forward.1} parent=1 // pred_fallthru
      _
    %v23 = vld [vmem:[%s0] sm:$0x3]
    %v24 = vld [vmem:[%s1] sm:$0xf]
    %v25 = vld [vmem:[%s1 + $0x4] sm:$0xf]
    %v26 = vld [vmem:[%s1 + $0x8] sm:$0xf]
    %v27 = vld [vmem:[%s1 + $0xc] sm:$0xf]
    %v28 = vld [vmem:[%s1 + $0x10] sm:$0xf]
    %v29 = vld [vmem:[%s1 + $0x14] sm:$0xf]
    %v30 = vld [vmem:[%s1 + $0x18] sm:$0xf]
    %v31 = vld [vmem:[%s1 + $0x1c] sm:$0xf]
    %v32 = vld [vmem:[%s2] sm:$0x1]
    %v34 = vperm.slane %v32, 0
    %v44 = vunpack.c.l.b16 %v24
    %v45 = vunpack.c.l.b16 %v25
    %v46 = vunpack.c.l.b16 %v26
    %v47 = vunpack.c.l.b16 %v27
    %v48 = vunpack.c.l.b16 %v28
    %v49 = vunpack.c.l.b16 %v29
    %v50 = vunpack.c.l.b16 %v30
    %v51 = vunpack.c.l.b16 %v31
    %v52 = vpack.c.b16 %v45, %v44
    %v53 = vpack.c.b16 %v47, %v46
    %v54 = vpack.c.b16 %v49, %v48
    %v55 = vpack.c.b16 %v51, %v50
    %vm60 = vcmask 523264
    %v62 = vsel %vm60, %v23, 0
    %64 = vmatpush.bf16.msra.mxu0 0
    %65 = vmatpush.bf16.msra.mxu0 0
    %66 = vmatpush.bf16.msra.mxu0 0
    %67 = vmatpush.bf16.msra.mxu0 0
    %68 = vmatpush.bf16.msra.mxu0 %v55
    %69 = vmatpush.bf16.msra.mxu0 %v54
    %70 = vmatpush.bf16.msra.mxu0 %v53
    %71 = vmatpush.bf16.msra.mxu0 %v52
    %72 = vmatmul.bf16.gmra.mxu0 %v62
    %v73 = vpop.f32.mrf.mxu0
    %v74 = vadd.f32 %v34, %v73
    %v75 = vpop.f32.mrf.mxu0
    %76 = vdwg.mxu0
    %vm77 = vcmask 117760
    %78 = vst.msk [vmem:[#allocation2] sm:$0xf] %vm77, %v74
    %v79 = vlaneseq
    %v80 = vand.u32 %v79, 127
    %v81 = vld [vmem:[%s3] sm:$0xf]
    %v82 = vadd.f32 %v74, %v81
    %v83 = vsel %vm77, %v82, -inf
    %84 = vmax.xlane.f32.xlu0 %v83
    %v85 = vpop.xlane.xlu0 %84
    %vm86 = vcmp.ge.f32.partialorder %v82, %v85
    %v87 = vcvt.s32.f32 %v80
    %v88 = vsel %vm86, %v87, 1e+09
    %v89 = vsel %vm77, %v88, inf
    %90 = vmin.xlane.f32.xlu0 %v89
    %v91 = vpop.xlane.xlu0 %90
    %v92 = vcvt.f32.s32.to.zero.pseudo %v91
    %vm93 = vcmask 3072
    %94 = vst.msk [vmem:[%s5] sm:$0xf] %vm93, %v92
    %v95 = vsel %vm77, %v74, -inf
    %96 = vmax.xlane.f32.xlu0 %v95
    %v97 = vpop.xlane.xlu0 %96
    %vm98 = vcmp.ge.f32.partialorder %v74, %v97
    %v99 = vsel %vm98, %v87, 1e+09
    %v100 = vsel %vm77, %v99, inf
    %101 = vmin.xlane.f32.xlu0 %v100
    %v102 = vpop.xlane.xlu0 %101
    %v103 = vcvt.f32.s32.to.zero.pseudo %v102
    %104 = vst.msk [vmem:[%s7] sm:$0xf] %vm93, %v103
    %v105 = vsub.f32 %v74, %v97
    %v106 = vmul.f32 %v105, 1.442695
    %v107 = vpow.pop %v106
    %v108 = vsel %vm77, %v107, 0.0
    %109 = vadd.xlane.f32.xlu0 %v108
    %v110 = vpop.xlane.xlu0 %109
    %v111 = vlog2.pop %v110
    %v112 = vmul.f32 %v111, 0.6931472
    %v113 = vadd.f32 %v97, %v112
    %v114 = vsub.f32 %v74, %v113
    %vm115 = vcmp.eq.s32.totalorder %v80, %v92
    %v116 = vsel %vm115, 1, 0
    %v117 = vcvt.s32.f32 %v116
    %v118 = vmul.f32 %v114, %v117
    %v119 = vsel %vm77, %v118, 0.0
    %120 = vadd.xlane.f32.xlu0 %v119
    %v121 = vpop.xlane.xlu0 %120
    %122 = vst.msk [vmem:[%s6] sm:$0xf] %vm93, %v121
    // Predicated region
    $region18: #{categorical_forward.1} parent=1 // pred_check
      _
    $region19: #{categorical_forward.1} parent=1 // pred_check_branch
      %124 = sbr.rel (0) target = $region21
    $region20: #{categorical_forward.1} parent=1 // pred_region
      %126 = vsyncadd [#allocation3], 0
      %s128 = sshll.u32 [#allocation2], 4
      %s129 = int_to_ptr.vmem [resolvable:$true] %s128
      %s130 = sshll.u32 %s4, 4
      %s131 = int_to_ptr.hbm [resolvable:$true] %s130
      %133 = dma.vmem_to_hbm [thread:$0]  %s129, 64, %s131, [#allocation3]
    $region21: #{categorical_forward.1} parent=1 // pred_fallthru
      _
    // Predicated region
    $region22: #{categorical_forward.1} parent=1 // pred_check
      _
    $region23: #{categorical_forward.1} parent=1 // pred_check_branch
      %135 = sbr.rel (0) target = $region25
    $region24: #{categorical_forward.1} parent=1 // pred_region
      _
    $region25: #{categorical_forward.1} parent=1 // pred_fallthru
      _
    // Predicated region
    $region26: #{categorical_forward.1} parent=1 // pred_check
      _
    $region27: #{categorical_forward.1} parent=1 // pred_check_branch
      %137 = sbr.rel (0) target = $region29
    $region28: #{categorical_forward.1} parent=1 // pred_region
      _
    $region29: #{categorical_forward.1} parent=1 // pred_fallthru
      _
    // Predicated region
    $region30: #{categorical_forward.1} parent=1 // pred_check
      _
    $region31: #{categorical_forward.1} parent=1 // pred_check_branch
      %139 = sbr.rel (0) target = $region33
    $region32: #{categorical_forward.1} parent=1 // pred_region
      _
    $region33: #{categorical_forward.1} parent=1 // pred_fallthru
      _
    // Predicated region
    $region34: #{categorical_forward.1} parent=1 // pred_check
      _
    $region35: #{categorical_forward.1} parent=1 // pred_check_branch
      %141 = sbr.rel (0) target = $region37
    $region36: #{categorical_forward.1} parent=1 // pred_region
      %143 = dma.done [#allocation3], 64
    $region37: #{categorical_forward.1} parent=1 // pred_fallthru
      _
    // Predicated region
    $region38: #{categorical_forward.1} parent=1 // pred_check
      _
    $region39: #{categorical_forward.1} parent=1 // pred_check_branch
      %145 = sbr.rel (0) target = $region41
    $region40: #{categorical_forward.1} parent=1 // pred_region
      _
    $region41: #{categorical_forward.1} parent=1 // pred_fallthru
      _
    // Predicated region
    $region42: #{categorical_forward.1} parent=1 // pred_check
      _
    $region43: #{categorical_forward.1} parent=1 // pred_check_branch
      %147 = sbr.rel (0) target = $region45
    $region44: #{categorical_forward.1} parent=1 // pred_region
      _
    $region45: #{categorical_forward.1} parent=1 // pred_fallthru
      _
    // Predicated region
    $region46: #{categorical_forward.1} parent=1 // pred_check
      _
    $region47: #{categorical_forward.1} parent=1 // pred_check_branch
      %149 = sbr.rel (0) target = $region49
    $region48: #{categorical_forward.1} parent=1 // pred_region
      _
    $region49: #{categorical_forward.1} parent=1 // pred_fallthru
      _
    %150 = vsyncpa [#allocation3], 1

</llo_original>
